<compile_context>
chip_gen: v6e
topology: v6e:2x2x1
jax: 0.10.0
libtpu: 0.0.40
codegen_flags: <defaults>
</compile_context>

<pallas_src>
import functools

import jax
import jax.numpy as jnp
from jax.experimental import pallas as pl
from jax.experimental.pallas import tpu as pltpu

_LANES = 128
_SUBLANES = 8
_MAX_BLOCK_ROWS = 8192                 # 8192 x 128 x 4B = 4 MiB f32 tile
_FUSED_MAX_BYTES = 8 * 1024 * 1024     # whole-array-in-VMEM fast-path cutoff
_VMEM_LIMIT = 32 * 1024 * 1024         # safe scoped-VMEM request (all gens)


def _round_up(n: int, m: int) -> int:
    return ((n + m - 1) // m) * m


# ---------------------------------------------------------------------------
# Fast path: whole array resident in VMEM, one pass (read N + write N).
# ---------------------------------------------------------------------------
def _fused_kernel(x_ref, o_ref, *, inv_total):
    x = x_ref[...]
    s = jnp.sum(x, dtype=jnp.float32)              # f32 accumulation
    m = (s * inv_total).astype(x.dtype)            # mean, native dtype
    o_ref[...] = x - m


# ---------------------------------------------------------------------------
# Streaming path, phase 1: tiled partial sums.
# grid = (2, tiles_per_core); leading axis "parallel" so on v7x each
# TensorCore reduces half the tiles.  Per-tile accumulation is VPU-only adds
# into an (8,128) f32 scratch; one cross-lane collapse per core at the end.
# ---------------------------------------------------------------------------
def _sum_kernel(x_ref, sum_ref, acc_ref, *, rows, block_rows, tiles_per_core):
    i = pl.program_id(1)

    @pl.when(i == 0)
    def _():
        acc_ref[...] = jnp.zeros_like(acc_ref)

    # Logical tile index; may point one past the last tile for the trailing
    # core (the index_map clamps the DMA, and valid <= 0 masks it all out).
    t = pl.program_id(0) * tiles_per_core + i
    valid = rows - t * block_rows                  # number of real rows here
    row_ids = jax.lax.broadcasted_iota(jnp.int32, (block_rows, _LANES), 0)
    x = jnp.where(row_ids < valid, x_ref[...], 0)
    acc_ref[...] += jnp.sum(
        x.reshape(block_rows // _SUBLANES, _SUBLANES, _LANES),
        axis=0, dtype=jnp.float32)

    @pl.when(i == tiles_per_core - 1)
    def _():
        sum_ref[...] = jnp.sum(acc_ref[...]).reshape(1, 1, 1)


# ---------------------------------------------------------------------------
# Streaming path, phase 2: X - mean, lane-dense unmasked stores.
# The two per-core partial sums sit in SMEM; the divide is folded in here so
# no serialized XLA op sits between the two pallas_calls.
# ---------------------------------------------------------------------------
def _sub_kernel(sums_ref, x_ref, o_ref, *, inv_total):
    s = sums_ref[0, 0, 0] + sums_ref[1, 0, 0]      # f32 scalars from SMEM
    m = (s * inv_total).astype(x_ref.dtype)
    o_ref[...] = x_ref[...] - m


def centered_layer(x: jax.Array,
                   *,
                   fused_max_bytes: int = _FUSED_MAX_BYTES,
                   max_block_rows: int = _MAX_BLOCK_ROWS) -> jax.Array:
    """X - X.mean() over all elements (PyTorch CenteredLayer semantics)."""
    orig_shape = x.shape
    total = int(x.size)
    itemsize = jnp.dtype(x.dtype).itemsize
    inv_total = 1.0 / float(total)

    # Lane-dense (rows, 128) layout.  Pad only when the element count is not
    # a multiple of 128 (at most 127 zeros; they do not perturb the sum).
    rows = -(-total // _LANES)
    padded_total = rows * _LANES
    flat = x.reshape(-1)
    if padded_total != total:
        flat = jnp.pad(flat, (0, padded_total - total))
    x2d = flat.reshape(rows, _LANES)

    if rows * _LANES * itemsize <= fused_max_bytes:
        # ---- single pass, whole array in VMEM (2N HBM traffic) -----------
        out2d = pl.pallas_call(
            functools.partial(_fused_kernel, inv_total=inv_total),
            out_shape=jax.ShapeDtypeStruct((rows, _LANES), x.dtype),
            in_specs=[pl.BlockSpec(memory_space=pltpu.MemorySpace.VMEM)],
            out_specs=pl.BlockSpec(memory_space=pltpu.MemorySpace.VMEM),
            compiler_params=pltpu.CompilerParams(
                vmem_limit_bytes=_VMEM_LIMIT),
        )(x2d)
    else:
        # ---- two-phase tiled streaming path -------------------------------
        block_rows = min(max_block_rows, _round_up(rows, _SUBLANES))
        num_tiles = pl.cdiv(rows, block_rows)
        tiles_per_core = -(-num_tiles // 2)

        def x_map(c, i):
            # Clamp so the trailing core's extra step never issues an
            # out-of-range block DMA (its contribution is masked to zero).
            return (jnp.minimum(c * tiles_per_core + i, num_tiles - 1), 0)

        partial_sums = pl.pallas_call(
            functools.partial(_sum_kernel, rows=rows, block_rows=block_rows,
                              tiles_per_core=tiles_per_core),
            out_shape=jax.ShapeDtypeStruct((2, 1, 1), jnp.float32),
            grid_spec=pltpu.PrefetchScalarGridSpec(
                num_scalar_prefetch=0,
                grid=(2, tiles_per_core),
                in_specs=[pl.BlockSpec((block_rows, _LANES), x_map)],
                out_specs=pl.BlockSpec((1, 1, 1), lambda c, i: (c, 0, 0)),
                scratch_shapes=[pltpu.VMEM((_SUBLANES, _LANES), jnp.float32)]),
            compiler_params=pltpu.CompilerParams(
                dimension_semantics=("parallel", "arbitrary"),
                vmem_limit_bytes=_VMEM_LIMIT),
        )(x2d)

        out2d = pl.pallas_call(
            functools.partial(_sub_kernel, inv_total=inv_total),
            out_shape=jax.ShapeDtypeStruct((rows, _LANES), x.dtype),
            grid_spec=pltpu.PrefetchScalarGridSpec(
                num_scalar_prefetch=0,
                grid=(num_tiles,),
                in_specs=[
                    pl.BlockSpec(memory_space=pltpu.MemorySpace.SMEM),
                    pl.BlockSpec((block_rows, _LANES), lambda i: (i, 0)),
                ],
                out_specs=pl.BlockSpec((block_rows, _LANES), lambda i: (i, 0)),
            ),
            compiler_params=pltpu.CompilerParams(
                dimension_semantics=("parallel",),
                vmem_limit_bytes=_VMEM_LIMIT),
        )(partial_sums, x2d)

    out_flat = out2d.reshape(-1)
    if padded_total != total:
        out_flat = out_flat[:total]
    return out_flat.reshape(orig_shape)


if __name__ == "__main__":
    # Small NCHW input consistent with typical CenteredLayer usage
    # (exercises the single-pass VMEM-resident fast path).
    key = jax.random.PRNGKey(0)
    x = jax.random.normal(key, (2, 4, 16, 16), dtype=jnp.float32)
    out = jax.block_until_ready(centered_layer(x))
    ref = x - jnp.mean(x)
    assert out.shape == x.shape and out.dtype == x.dtype
    assert jnp.allclose(out, ref, atol=1e-5, rtol=1e-5), "fused path mismatch"

    # Force the two-phase streaming path (small tiles) to also verify the
    # 2-TensorCore split, ragged-tile masking and the clamped trailing tile.
    x2 = jax.random.normal(jax.random.PRNGKey(1), (4, 4, 41, 128),
                           dtype=jnp.float32)
    out2 = jax.block_until_ready(
        centered_layer(x2, fused_max_bytes=0, max_block_rows=256))
    ref2 = x2 - jnp.mean(x2)
    assert jnp.allclose(out2, ref2, atol=1e-5, rtol=1e-5), "tiled path mismatch"

    # Element count not a multiple of 128 (minimal-pad path).
    x3 = jax.random.normal(jax.random.PRNGKey(2), (3, 5, 7), dtype=jnp.float32)
    out3 = jax.block_until_ready(centered_layer(x3))
    ref3 = x3 - jnp.mean(x3)
    assert jnp.allclose(out3, ref3, atol=1e-5, rtol=1e-5), "ragged-pad mismatch"

    print("KERNEL_OK")
</pallas_src>

<mosaic_0001>
module attributes {stable_mosaic.version = 11 : i64} {
  func.func @_fused_kernel(%arg0: memref<16x128xf32, #tpu.memory_space<vmem>>, %arg1: memref<16x128xf32, #tpu.memory_space<vmem>>) attributes {dimension_semantics = [], scalar_prefetch = 0 : i64, scratch_operands = 0 : i64, tpu.core_type = #tpu.core_type<tc>} {
    %c0 = arith.constant 0 : index
    %c0_0 = arith.constant 0 : index
    %0 = vector.load %arg0[%c0, %c0_0] : memref<16x128xf32, #tpu.memory_space<vmem>>, vector<16x128xf32>
    %1 = vector.shape_cast %0 : vector<16x128xf32> to vector<1x16x128xf32>
    %cst = arith.constant dense<0.000000e+00> : vector<1xf32>
    %2 = vector.multi_reduction <add>, %1, %cst [1, 2] : vector<1x16x128xf32> to vector<1xf32>
    %3 = vector.shape_cast %2 : vector<1xf32> to vector<1x1x1xf32>
    %4 = vector.extract %3[0, 0, 0] : f32 from vector<1x1x1xf32>
    %cst_1 = arith.constant 4.8828125E-4 : f32
    %5 = arith.mulf %4, %cst_1 : f32
    %6 = vector.broadcast %5 : f32 to vector<16x128xf32>
    %7 = arith.subf %0, %6 : vector<16x128xf32>
    %c0_2 = arith.constant 0 : index
    %c0_3 = arith.constant 0 : index
    %8 = vector.load %arg1[%c0_2, %c0_3] : memref<16x128xf32, #tpu.memory_space<vmem>>, vector<16x128xf32>
    tpu.vector_store %arg1[%c0_2, %c0_3], %7 {strides = array<i32>} : memref<16x128xf32, #tpu.memory_space<vmem>>, vector<16x128xf32>,
    return
  }
}

</mosaic_0001>

<llo_original>
// kernel: tpu_custom_call.1
$region0: #{tpu_custom_call.1}
  #allocation0 [shape = 'u32[]', space=smem, size = 0x4, offset = 0x4, fixed_abs, tag = 'smem constant byte address 0x4 - core index']
  #allocation1 [shape = 'u32[144,128]{1,0:T(1,128)}', space=vmem, size = 0x12000, scoped, tag = 'internal scratch']
  %s0 = inlined_call_operand.hbm [shape: f32[16,128], index: 0, kind: input, shape index: {}]
  %s1 = inlined_call_operand.hbm [shape: f32[16,128], index: 1, kind: output, shape index: {}]
  %s2 = sld [smem:[#allocation0]]
  $region18: #{tpu_custom_call.1} parent=0
    _
  %s4 = ssub.s32 1, %s2
  %s5 = scalar_select 0, %s4, %s2
  $region1: #{tpu_custom_call.1} parent=0
    #allocation2 [shape = 'u8[8192]{0}', space=vmem, size = 0x2000, scoped, tag = 'input window, operand 0, single buffered']
    #allocation3 [shape = 's32[1]{0}', space=sflag, size = 0x4, scoped, tag = 'scoped memory for tpu_custom_call.1']
    #allocation4 [shape = 's32[1]{0}', space=sflag, size = 0x4, scoped, tag = 'scoped memory for tpu_custom_call.1']
    #allocation5 [shape = 'u8[8192]{0}', space=vmem, size = 0x2000, scoped, tag = 'output window, operand 0, single buffered']
    %6 = vsyncpa [#allocation3], 0
    %7 = vsyncpa [#allocation4], 0
    // Predicated region
    $region2: #{tpu_custom_call.1} parent=1 // pred_check
      _
    $region3: #{tpu_custom_call.1} parent=1 // pred_check_branch
      %9 = sbr.rel (0) target = $region5
    $region4: #{tpu_custom_call.1} parent=1 // pred_region
      %s11 = ssub.s32 256, 256
      %12 = vsyncadd [#allocation3], %s11
      %s13 = sshll.u32 [#allocation2], 4
      %s14 = int_to_ptr.vmem [resolvable:$true] %s13
      %19 = dma.hbm_to_vmem [thread:$0]  %s0, 256, %s14, [#allocation3], 128, 128, 8
    $region5: #{tpu_custom_call.1} parent=1 // pred_fallthru
      _
    // Predicated region
    $region6: #{tpu_custom_call.1} parent=1 // pred_check
      _
    $region7: #{tpu_custom_call.1} parent=1 // pred_check_branch
      %21 = sbr.rel (0) target = $region9
    $region8: #{tpu_custom_call.1} parent=1 // pred_region
      %22 = dma.done [#allocation3], 256
    $region9: #{tpu_custom_call.1} parent=1 // pred_fallthru
      _
    %v23 = vld [vmem:[#allocation2] sm:$0xff]
    %v24 = vld [vmem:[#allocation2 + $0x8] sm:$0xff]
    %v25 = vadd.f32 %v23, %v24
    %26 = vadd.xlane.f32.xlu0 %v25
    %v27 = vpop.xlane.xlu0 %26
    %v28 = vrot.slane %v27, 4
    %v29 = vadd.f32 %v27, %v28
    %v30 = vrot.slane %v29, 2
    %v31 = vadd.f32 %v29, %v30
    %v32 = vrot.slane %v31, 1
    %v33 = vadd.f32 %v31, %v32
    %s34 = vtos %v33
    %s35 = smul.f32 %s34, 0.00048828125
    %v36 = vstv %s35
    %v37 = vsub.f32 %v23, %v36
    %v38 = vsub.f32 %v24, %v36
    %39 = vst [vmem:[#allocation5] sm:$0xff] %v37
    %40 = vst [vmem:[#allocation5 + $0x8] sm:$0xff] %v38
    // Predicated region
    $region10: #{tpu_custom_call.1} parent=1 // pred_check
      _
    $region11: #{tpu_custom_call.1} parent=1 // pred_check_branch
      %42 = sbr.rel (0) target = $region13
    $region12: #{tpu_custom_call.1} parent=1 // pred_region
      %s44 = ssub.s32 256, 256
      %45 = vsyncadd [#allocation4], %s44
      %s46 = sshll.u32 [#allocation5], 4
      %s47 = int_to_ptr.vmem [resolvable:$true] %s46
      %52 = dma.vmem_to_hbm [thread:$0]  %s47, 256, %s1, [#allocation4], 128, 128, 8
    $region13: #{tpu_custom_call.1} parent=1 // pred_fallthru
      _
    // Predicated region
    $region14: #{tpu_custom_call.1} parent=1 // pred_check
      _
    $region15: #{tpu_custom_call.1} parent=1 // pred_check_branch
      %54 = sbr.rel (0) target = $region17
    $region16: #{tpu_custom_call.1} parent=1 // pred_region
      %55 = dma.done [#allocation4], 256
    $region17: #{tpu_custom_call.1} parent=1 // pred_fallthru
      _
    %56 = vsyncpa [#allocation3], 1
    %57 = vsyncpa [#allocation4], 1

</llo_original>
